<compile_context>
chip_gen: v7x
topology: tpu7x:2x2x1
jax: 0.10.0
libtpu: 0.0.40
codegen_flags: <defaults>
</compile_context>

<pallas_src>
import functools

import jax
import jax.numpy as jnp
from jax import lax
from jax.experimental import pallas as pl
from jax.experimental.pallas import tpu as pltpu

_VMEM = pl.BlockSpec(memory_space=pltpu.MemorySpace.VMEM)
_LANE = 128


def _round_up(d, m=_LANE):
    return ((d + m - 1) // m) * m


def _pad2(x, shape):
    """Zero-pad a 2-D array up to `shape`."""
    r = shape[0] - x.shape[0]
    c = shape[1] - x.shape[1]
    if r == 0 and c == 0:
        return x
    return jnp.pad(x, ((0, r), (0, c)))


def _dot_bf16(a, b):
    """MXU matmul: bf16 operands, f32 accumulation."""
    return jnp.dot(a.astype(jnp.bfloat16), b.astype(jnp.bfloat16),
                   preferred_element_type=jnp.float32)


def _gat_block(a, h_src, h_dst, w_src, w_dst, attn_l, attn_r, bias):
    """Single-head DGL GATConv: fused fc_src/fc_dst projections + masked
    edge-softmax + attention-weighted aggregation. Element-wise math in f32."""
    fs = _dot_bf16(h_src, w_src)                                   # (n_src, F)
    fd = _dot_bf16(h_dst, w_dst)                                   # (n_dst, F)
    # el[j] = <fs[j], attn_l>, produced directly as a (1, n_src) row so no
    # column->row relayout (XLU transpose) is needed.
    el = lax.dot_general(attn_l, fs, (((1,), (1,)), ((), ())),
                         preferred_element_type=jnp.float32)       # (1, n_src)
    er = jnp.sum(fd * attn_r, axis=1, keepdims=True)               # (n_dst, 1)
    e = er + el                                                    # (n_dst, n_src)
    e = jnp.where(e > 0.0, e, 0.2 * e)                             # LeakyReLU(0.2)
    e = jnp.where(a > 0.0, e, jnp.float32(-1e30))                  # mask non-edges
    e_max = jnp.max(e, axis=1, keepdims=True)
    p = jnp.exp(e - e_max) * a                                     # masked exp
    denom = jnp.maximum(jnp.sum(p, axis=1, keepdims=True), 1e-20)
    alpha = p * pl.reciprocal(denom, approx=True)                  # 0-in-deg -> 0s
    rst = _dot_bf16(alpha, fs) + bias
    return rst, alpha


def _fused_gnn_kernel(
    a_nn_ref, a_np_ref, a_pq_ref, feat_n_ref, feat_q_ref,
    gcn_w_ref, gcn_b_ref,
    np_ws_ref, np_wd_ref, np_al_ref, np_ar_ref, np_b_ref,
    pq_ws_ref, pq_wd_ref, pq_al_ref, pq_ar_ref, pq_b_ref,
    out_ref, att_ref,
    *, inv_n_src_pq,
):
    neg = jnp.float32(-1e30)

    # ---- 1) DGL GraphConv(norm='both') on the N-N subgraph ------------------
    a_nn = a_nn_ref[...]                                    # (n_N, n_N)
    x_n = feat_n_ref[...]                                   # (n_N, Din_pad)
    # TODO(synk): DGL raises on zero-in-degree unless allow_zero_in_degree;
    # we clamp degrees to 1 instead (isolated nodes differ from the reference).
    src_deg = jnp.maximum(jnp.sum(a_nn, axis=0, keepdims=True), 1.0)  # out-deg(src)
    dst_deg = jnp.maximum(jnp.sum(a_nn, axis=1, keepdims=True), 1.0)  # in-deg(dst)
    agg = _dot_bf16(a_nn * lax.rsqrt(src_deg), x_n) * lax.rsqrt(dst_deg)
    h_n = _dot_bf16(agg, gcn_w_ref[...]) + gcn_b_ref[...]   # (n_N, Din_pad)

    # ---- 2) update_all(copy_u, max) over N->P edges, then ReLU ---------------
    a_np = a_np_ref[...]                                    # (n_P, n_N)
    n_p, n_n = a_np.shape
    d = h_n.shape[1]
    a3 = jnp.broadcast_to(a_np[:, :, None], (n_p, n_n, d))
    h3 = jnp.broadcast_to(h_n[None, :, :], (n_p, n_n, d))
    m = jnp.max(jnp.where(a3 > 0.0, h3, neg), axis=1)       # (n_P, Din_pad)
    # zero-in-degree rows end up at -1e30; ReLU clamps them (and everything
    # else) to >= 0, which matches F.relu(h_p) in the reference.
    h_p = jnp.maximum(m, 0.0)

    # ---- 3) GATConv (N, P) -> hid, 1 head (attention not materialized) ------
    h_p2, _ = _gat_block(a_np, h_n, h_p,
                         np_ws_ref[...], np_wd_ref[...],
                         np_al_ref[...], np_ar_ref[...], np_b_ref[...])

    # ---- 4) GATConv (P, Q) -> out, 1 head, with attention --------------------
    a_pq = a_pq_ref[...]                                    # (n_Q, n_P)
    out_q, alpha = _gat_block(a_pq, h_p2, feat_q_ref[...],
                              pq_ws_ref[...], pq_wd_ref[...],
                              pq_al_ref[...], pq_ar_ref[...], pq_b_ref[...])
    out_ref[...] = out_q
    # TODO(synk): DGL returns per-edge attention; `gat_att[...,0,0].mean(1)` is
    # ill-defined on a 1-D edge tensor, so we return the dense (n_Q, n_P)
    # attention averaged over source columns (computed in-kernel).
    att_mean = jnp.sum(alpha, axis=1, keepdims=True) * inv_n_src_pq   # (n_Q, 1)
    # Lane-dense store: broadcast across the full 128-lane row so the output
    # write is an unmasked vst; the wrapper slices column 0.
    att_ref[...] = jnp.broadcast_to(att_mean, att_ref.shape)


# --------------------------------- forward -------------------------------------
def custom_gnn_forward(params, a_nn, a_np, a_pq, feat_n, feat_q):
    in_dim = feat_n.shape[1]
    hid_dim = params["np_w_src"].shape[1]
    out_dim = params["pq_w_src"].shape[1]
    n_N, n_P, n_Q = a_nn.shape[0], a_np.shape[0], a_pq.shape[0]

    in_p, hid_p, out_p = _round_up(in_dim), _round_up(hid_dim), _round_up(out_dim)

    # Zero-pad feature / hidden / output dims to full 128-lane width; padded
    # columns remain exactly zero through every stage and are sliced off below.
    args = (
        a_nn, a_np, a_pq,
        _pad2(feat_n, (n_N, in_p)),
        _pad2(feat_q, (n_Q, in_p)),
        _pad2(params["gcn_w"], (in_p, in_p)),
        _pad2(params["gcn_b"].reshape(1, -1), (1, in_p)),
        _pad2(params["np_w_src"], (in_p, hid_p)),
        _pad2(params["np_w_dst"], (in_p, hid_p)),
        _pad2(params["np_attn_l"].reshape(1, -1), (1, hid_p)),
        _pad2(params["np_attn_r"].reshape(1, -1), (1, hid_p)),
        _pad2(params["np_bias"].reshape(1, -1), (1, hid_p)),
        _pad2(params["pq_w_src"], (hid_p, out_p)),
        _pad2(params["pq_w_dst"], (in_p, out_p)),
        _pad2(params["pq_attn_l"].reshape(1, -1), (1, out_p)),
        _pad2(params["pq_attn_r"].reshape(1, -1), (1, out_p)),
        _pad2(params["pq_bias"].reshape(1, -1), (1, out_p)),
    )

    out_q_pad, att = pl.pallas_call(
        functools.partial(_fused_gnn_kernel, inv_n_src_pq=1.0 / float(n_P)),
        out_shape=(
            jax.ShapeDtypeStruct((n_Q, out_p), jnp.float32),
            jax.ShapeDtypeStruct((n_Q, _LANE), jnp.float32),
        ),
        in_specs=[_VMEM] * len(args),
        out_specs=(_VMEM, _VMEM),
        compiler_params=pltpu.CompilerParams(vmem_limit_bytes=32 * 1024 * 1024),
    )(*args)

    return out_q_pad[:, :out_dim], att[:, 0]


# --------------------------------- params --------------------------------------
def init_params(key, in_dim, hid_dim, out_dim):
    ks = jax.random.split(key, 12)
    s = 0.1
    return {
        # GraphConv(in_dim, in_dim)
        "gcn_w": s * jax.random.normal(ks[0], (in_dim, in_dim), jnp.float32),
        "gcn_b": s * jax.random.normal(ks[1], (in_dim,), jnp.float32),
        # GATConv((in_dim, in_dim), hid_dim, 1)
        "np_w_src": s * jax.random.normal(ks[2], (in_dim, hid_dim), jnp.float32),
        "np_w_dst": s * jax.random.normal(ks[3], (in_dim, hid_dim), jnp.float32),
        "np_attn_l": s * jax.random.normal(ks[4], (hid_dim,), jnp.float32),
        "np_attn_r": s * jax.random.normal(ks[5], (hid_dim,), jnp.float32),
        "np_bias": s * jax.random.normal(ks[6], (hid_dim,), jnp.float32),
        # GATConv((hid_dim, in_dim), out_dim, 1)
        "pq_w_src": s * jax.random.normal(ks[7], (hid_dim, out_dim), jnp.float32),
        "pq_w_dst": s * jax.random.normal(ks[8], (in_dim, out_dim), jnp.float32),
        "pq_attn_l": s * jax.random.normal(ks[9], (out_dim,), jnp.float32),
        "pq_attn_r": s * jax.random.normal(ks[10], (out_dim,), jnp.float32),
        "pq_bias": s * jax.random.normal(ks[11], (out_dim,), jnp.float32),
    }


if __name__ == "__main__":
    in_dim, hid_dim, out_dim = 8, 16, 8
    n_N, n_P, n_Q = 16, 8, 8

    key = jax.random.PRNGKey(0)
    k_feat_n, k_feat_q, k_nn, k_np, k_pq, k_params = jax.random.split(key, 6)

    feat_n = jax.random.normal(k_feat_n, (n_N, in_dim), jnp.float32)
    feat_q = jax.random.normal(k_feat_q, (n_Q, in_dim), jnp.float32)
    a_nn = jax.random.bernoulli(k_nn, 0.3, (n_N, n_N)).astype(jnp.float32)
    a_np = jax.random.bernoulli(k_np, 0.4, (n_P, n_N)).astype(jnp.float32)
    a_pq = jax.random.bernoulli(k_pq, 0.4, (n_Q, n_P)).astype(jnp.float32)

    params = init_params(k_params, in_dim, hid_dim, out_dim)

    fwd = jax.jit(custom_gnn_forward)
    out_q, att_mean = fwd(params, a_nn, a_np, a_pq, feat_n, feat_q)
    jax.block_until_ready((out_q, att_mean))

    assert out_q.shape == (n_Q, out_dim)
    assert att_mean.shape == (n_Q,)
    assert bool(jnp.all(jnp.isfinite(out_q))) and bool(jnp.all(jnp.isfinite(att_mean)))
    print("KERNEL_OK")
</pallas_src>

<mosaic_0001>
module attributes {stable_mosaic.version = 11 : i64} {
  func.func @_fused_gnn_kernel(%arg0: memref<16x16xf32, #tpu.memory_space<vmem>>, %arg1: memref<8x16xf32, #tpu.memory_space<vmem>>, %arg2: memref<8x8xf32, #tpu.memory_space<vmem>>, %arg3: memref<16x128xf32, #tpu.memory_space<vmem>>, %arg4: memref<8x128xf32, #tpu.memory_space<vmem>>, %arg5: memref<128x128xf32, #tpu.memory_space<vmem>>, %arg6: memref<1x128xf32, #tpu.memory_space<vmem>>, %arg7: memref<128x128xf32, #tpu.memory_space<vmem>>, %arg8: memref<128x128xf32, #tpu.memory_space<vmem>>, %arg9: memref<1x128xf32, #tpu.memory_space<vmem>>, %arg10: memref<1x128xf32, #tpu.memory_space<vmem>>, %arg11: memref<1x128xf32, #tpu.memory_space<vmem>>, %arg12: memref<128x128xf32, #tpu.memory_space<vmem>>, %arg13: memref<128x128xf32, #tpu.memory_space<vmem>>, %arg14: memref<1x128xf32, #tpu.memory_space<vmem>>, %arg15: memref<1x128xf32, #tpu.memory_space<vmem>>, %arg16: memref<1x128xf32, #tpu.memory_space<vmem>>, %arg17: memref<8x128xf32, #tpu.memory_space<vmem>>, %arg18: memref<8x128xf32, #tpu.memory_space<vmem>>) attributes {dimension_semantics = [], scalar_prefetch = 0 : i64, scratch_operands = 0 : i64, tpu.core_type = #tpu.core_type<tc>} {
    %c0 = arith.constant 0 : index
    %c0_0 = arith.constant 0 : index
    %0 = vector.load %arg0[%c0, %c0_0] : memref<16x16xf32, #tpu.memory_space<vmem>>, vector<16x16xf32>
    %c0_1 = arith.constant 0 : index
    %c0_2 = arith.constant 0 : index
    %1 = vector.load %arg3[%c0_1, %c0_2] : memref<16x128xf32, #tpu.memory_space<vmem>>, vector<16x128xf32>
    %cst = arith.constant dense<0.000000e+00> : vector<16xf32>
    %2 = vector.multi_reduction <add>, %0, %cst [0] : vector<16x16xf32> to vector<16xf32>
    %3 = vector.shape_cast %2 : vector<16xf32> to vector<1x16xf32>
    %cst_3 = arith.constant 1.000000e+00 : f32
    %4 = vector.broadcast %cst_3 : f32 to vector<1x16xf32>
    %5 = arith.maximumf %3, %4 : vector<1x16xf32>
    %cst_4 = arith.constant dense<0.000000e+00> : vector<16xf32>
    %6 = vector.multi_reduction <add>, %0, %cst_4 [1] : vector<16x16xf32> to vector<16xf32>
    %7 = vector.shape_cast %6 : vector<16xf32> to vector<16x1xf32>
    %cst_5 = arith.constant 1.000000e+00 : f32
    %8 = vector.broadcast %cst_5 : f32 to vector<16x1xf32>
    %9 = arith.maximumf %7, %8 : vector<16x1xf32>
    %10 = math.rsqrt %5 : vector<1x16xf32>
    %11 = vector.broadcast %10 : vector<1x16xf32> to vector<16x16xf32>
    %12 = arith.mulf %0, %11 : vector<16x16xf32>
    %13 = arith.truncf %12 : vector<16x16xf32> to vector<16x16xbf16>
    %14 = arith.truncf %1 : vector<16x128xf32> to vector<16x128xbf16>
    %cst_6 = arith.constant dense<0.000000e+00> : vector<16x128xf32>
    %15 = tpu.matmul %13, %14, %cst_6 {dimension_numbers = #tpu.dot_dimension_numbers<[1], [0], [0], [1], [0, 0, 1, 1], [], []>} : vector<16x16xbf16>, vector<16x128xbf16>, vector<16x128xf32> -> vector<16x128xf32>
    %16 = math.rsqrt %9 : vector<16x1xf32>
    %17 = vector.broadcast %16 : vector<16x1xf32> to vector<16x128xf32>
    %18 = arith.mulf %15, %17 : vector<16x128xf32>
    %c0_7 = arith.constant 0 : index
    %c0_8 = arith.constant 0 : index
    %19 = vector.load %arg5[%c0_7, %c0_8] : memref<128x128xf32, #tpu.memory_space<vmem>>, vector<128x128xf32>
    %20 = arith.truncf %18 : vector<16x128xf32> to vector<16x128xbf16>
    %21 = arith.truncf %19 : vector<128x128xf32> to vector<128x128xbf16>
    %cst_9 = arith.constant dense<0.000000e+00> : vector<16x128xf32>
    %22 = tpu.matmul %20, %21, %cst_9 {dimension_numbers = #tpu.dot_dimension_numbers<[1], [0], [0], [1], [0, 0, 1, 1], [], []>} : vector<16x128xbf16>, vector<128x128xbf16>, vector<16x128xf32> -> vector<16x128xf32>
    %c0_10 = arith.constant 0 : index
    %c0_11 = arith.constant 0 : index
    %23 = vector.load %arg6[%c0_10, %c0_11] : memref<1x128xf32, #tpu.memory_space<vmem>>, vector<1x128xf32>
    %24 = vector.broadcast %23 : vector<1x128xf32> to vector<16x128xf32>
    %25 = arith.addf %22, %24 : vector<16x128xf32>
    %c0_12 = arith.constant 0 : index
    %c0_13 = arith.constant 0 : index
    %26 = vector.load %arg1[%c0_12, %c0_13] : memref<8x16xf32, #tpu.memory_space<vmem>>, vector<8x16xf32>
    %27 = vector.shape_cast %26 : vector<8x16xf32> to vector<8x16x1xf32>
    %28 = vector.shape_cast %27 : vector<8x16x1xf32> to vector<8x16x1xf32>
    %29 = vector.broadcast %28 : vector<8x16x1xf32> to vector<8x16x128xf32>
    %30 = vector.shape_cast %25 : vector<16x128xf32> to vector<1x16x128xf32>
    %31 = vector.shape_cast %30 : vector<1x16x128xf32> to vector<1x16x128xf32>
    %32 = vector.broadcast %31 : vector<1x16x128xf32> to vector<8x16x128xf32>
    %cst_14 = arith.constant 0.000000e+00 : f32
    %33 = vector.broadcast %cst_14 : f32 to vector<8x16x128xf32>
    %34 = arith.cmpf ogt, %29, %33 : vector<8x16x128xf32>
    %cst_15 = arith.constant -1.000000e+30 : f32
    %35 = vector.broadcast %cst_15 : f32 to vector<8x16x128xf32>
    %36 = arith.select %34, %32, %35 : vector<8x16x128xi1>, vector<8x16x128xf32>
    %cst_16 = arith.constant dense<0xFF800000> : vector<8x128xf32>
    %37 = vector.multi_reduction <maximumf>, %36, %cst_16 [1] : vector<8x16x128xf32> to vector<8x128xf32>
    %cst_17 = arith.constant 0.000000e+00 : f32
    %38 = vector.broadcast %cst_17 : f32 to vector<8x128xf32>
    %39 = arith.maximumf %37, %38 : vector<8x128xf32>
    %c0_18 = arith.constant 0 : index
    %c0_19 = arith.constant 0 : index
    %40 = vector.load %arg7[%c0_18, %c0_19] : memref<128x128xf32, #tpu.memory_space<vmem>>, vector<128x128xf32>
    %c0_20 = arith.constant 0 : index
    %c0_21 = arith.constant 0 : index
    %41 = vector.load %arg8[%c0_20, %c0_21] : memref<128x128xf32, #tpu.memory_space<vmem>>, vector<128x128xf32>
    %c0_22 = arith.constant 0 : index
    %c0_23 = arith.constant 0 : index
    %42 = vector.load %arg9[%c0_22, %c0_23] : memref<1x128xf32, #tpu.memory_space<vmem>>, vector<1x128xf32>
    %c0_24 = arith.constant 0 : index
    %c0_25 = arith.constant 0 : index
    %43 = vector.load %arg10[%c0_24, %c0_25] : memref<1x128xf32, #tpu.memory_space<vmem>>, vector<1x128xf32>
    %c0_26 = arith.constant 0 : index
    %c0_27 = arith.constant 0 : index
    %44 = vector.load %arg11[%c0_26, %c0_27] : memref<1x128xf32, #tpu.memory_space<vmem>>, vector<1x128xf32>
    %45 = arith.truncf %25 : vector<16x128xf32> to vector<16x128xbf16>
    %46 = arith.truncf %40 : vector<128x128xf32> to vector<128x128xbf16>
    %cst_28 = arith.constant dense<0.000000e+00> : vector<16x128xf32>
    %47 = tpu.matmul %45, %46, %cst_28 {dimension_numbers = #tpu.dot_dimension_numbers<[1], [0], [0], [1], [0, 0, 1, 1], [], []>} : vector<16x128xbf16>, vector<128x128xbf16>, vector<16x128xf32> -> vector<16x128xf32>
    %48 = arith.truncf %39 : vector<8x128xf32> to vector<8x128xbf16>
    %49 = arith.truncf %41 : vector<128x128xf32> to vector<128x128xbf16>
    %cst_29 = arith.constant dense<0.000000e+00> : vector<8x128xf32>
    %50 = tpu.matmul %48, %49, %cst_29 {dimension_numbers = #tpu.dot_dimension_numbers<[1], [0], [0], [1], [0, 0, 1, 1], [], []>} : vector<8x128xbf16>, vector<128x128xbf16>, vector<8x128xf32> -> vector<8x128xf32>
    %cst_30 = arith.constant dense<0.000000e+00> : vector<1x16xf32>
    %51 = tpu.matmul %42, %47, %cst_30 {dimension_numbers = #tpu.dot_dimension_numbers<[1], [1], [0], [0], [0, 0, 1, 0], [], []>} : vector<1x128xf32>, vector<16x128xf32>, vector<1x16xf32> -> vector<1x16xf32>
    %52 = vector.broadcast %43 : vector<1x128xf32> to vector<8x128xf32>
    %53 = arith.mulf %50, %52 : vector<8x128xf32>
    %cst_31 = arith.constant dense<0.000000e+00> : vector<8xf32>
    %54 = vector.multi_reduction <add>, %53, %cst_31 [1] : vector<8x128xf32> to vector<8xf32>
    %55 = vector.shape_cast %54 : vector<8xf32> to vector<8x1xf32>
    %56 = vector.broadcast %55 : vector<8x1xf32> to vector<8x16xf32>
    %57 = vector.broadcast %51 : vector<1x16xf32> to vector<8x16xf32>
    %58 = arith.addf %56, %57 : vector<8x16xf32>
    %cst_32 = arith.constant 0.000000e+00 : f32
    %59 = vector.broadcast %cst_32 : f32 to vector<8x16xf32>
    %60 = arith.cmpf ogt, %58, %59 : vector<8x16xf32>
    %cst_33 = arith.constant 2.000000e-01 : f32
    %61 = vector.broadcast %cst_33 : f32 to vector<8x16xf32>
    %62 = arith.mulf %61, %58 : vector<8x16xf32>
    %63 = arith.select %60, %58, %62 : vector<8x16xi1>, vector<8x16xf32>
    %cst_34 = arith.constant 0.000000e+00 : f32
    %64 = vector.broadcast %cst_34 : f32 to vector<8x16xf32>
    %65 = arith.cmpf ogt, %26, %64 : vector<8x16xf32>
    %cst_35 = arith.constant -1.000000e+30 : f32
    %66 = vector.broadcast %cst_35 : f32 to vector<8x16xf32>
    %67 = arith.select %65, %63, %66 : vector<8x16xi1>, vector<8x16xf32>
    %cst_36 = arith.constant dense<0xFF800000> : vector<8xf32>
    %68 = vector.multi_reduction <maximumf>, %67, %cst_36 [1] : vector<8x16xf32> to vector<8xf32>
    %69 = vector.shape_cast %68 : vector<8xf32> to vector<8x1xf32>
    %70 = vector.broadcast %69 : vector<8x1xf32> to vector<8x16xf32>
    %71 = arith.subf %67, %70 : vector<8x16xf32>
    %72 = math.exp %71 : vector<8x16xf32>
    %73 = arith.mulf %72, %26 : vector<8x16xf32>
    %cst_37 = arith.constant dense<0.000000e+00> : vector<8xf32>
    %74 = vector.multi_reduction <add>, %73, %cst_37 [1] : vector<8x16xf32> to vector<8xf32>
    %75 = vector.shape_cast %74 : vector<8xf32> to vector<8x1xf32>
    %cst_38 = arith.constant 9.99999968E-21 : f32
    %76 = vector.broadcast %cst_38 : f32 to vector<8x1xf32>
    %77 = arith.maximumf %75, %76 : vector<8x1xf32>
    %78 = tpu.reciprocal %77 {approx = true} : vector<8x1xf32> -> vector<8x1xf32>
    %79 = vector.broadcast %78 : vector<8x1xf32> to vector<8x16xf32>
    %80 = arith.mulf %73, %79 : vector<8x16xf32>
    %81 = arith.truncf %80 : vector<8x16xf32> to vector<8x16xbf16>
    %82 = arith.truncf %47 : vector<16x128xf32> to vector<16x128xbf16>
    %cst_39 = arith.constant dense<0.000000e+00> : vector<8x128xf32>
    %83 = tpu.matmul %81, %82, %cst_39 {dimension_numbers = #tpu.dot_dimension_numbers<[1], [0], [0], [1], [0, 0, 1, 1], [], []>} : vector<8x16xbf16>, vector<16x128xbf16>, vector<8x128xf32> -> vector<8x128xf32>
    %84 = vector.broadcast %44 : vector<1x128xf32> to vector<8x128xf32>
    %85 = arith.addf %83, %84 : vector<8x128xf32>
    %c0_40 = arith.constant 0 : index
    %c0_41 = arith.constant 0 : index
    %86 = vector.load %arg2[%c0_40, %c0_41] : memref<8x8xf32, #tpu.memory_space<vmem>>, vector<8x8xf32>
    %c0_42 = arith.constant 0 : index
    %c0_43 = arith.constant 0 : index
    %87 = vector.load %arg4[%c0_42, %c0_43] : memref<8x128xf32, #tpu.memory_space<vmem>>, vector<8x128xf32>
    %c0_44 = arith.constant 0 : index
    %c0_45 = arith.constant 0 : index
    %88 = vector.load %arg12[%c0_44, %c0_45] : memref<128x128xf32, #tpu.memory_space<vmem>>, vector<128x128xf32>
    %c0_46 = arith.constant 0 : index
    %c0_47 = arith.constant 0 : index
    %89 = vector.load %arg13[%c0_46, %c0_47] : memref<128x128xf32, #tpu.memory_space<vmem>>, vector<128x128xf32>
    %c0_48 = arith.constant 0 : index
    %c0_49 = arith.constant 0 : index
    %90 = vector.load %arg14[%c0_48, %c0_49] : memref<1x128xf32, #tpu.memory_space<vmem>>, vector<1x128xf32>
    %c0_50 = arith.constant 0 : index
    %c0_51 = arith.constant 0 : index
    %91 = vector.load %arg15[%c0_50, %c0_51] : memref<1x128xf32, #tpu.memory_space<vmem>>, vector<1x128xf32>
    %c0_52 = arith.constant 0 : index
    %c0_53 = arith.constant 0 : index
    %92 = vector.load %arg16[%c0_52, %c0_53] : memref<1x128xf32, #tpu.memory_space<vmem>>, vector<1x128xf32>
    %93 = arith.truncf %85 : vector<8x128xf32> to vector<8x128xbf16>
    %94 = arith.truncf %88 : vector<128x128xf32> to vector<128x128xbf16>
    %cst_54 = arith.constant dense<0.000000e+00> : vector<8x128xf32>
    %95 = tpu.matmul %93, %94, %cst_54 {dimension_numbers = #tpu.dot_dimension_numbers<[1], [0], [0], [1], [0, 0, 1, 1], [], []>} : vector<8x128xbf16>, vector<128x128xbf16>, vector<8x128xf32> -> vector<8x128xf32>
    %96 = arith.truncf %87 : vector<8x128xf32> to vector<8x128xbf16>
    %97 = arith.truncf %89 : vector<128x128xf32> to vector<128x128xbf16>
    %cst_55 = arith.constant dense<0.000000e+00> : vector<8x128xf32>
    %98 = tpu.matmul %96, %97, %cst_55 {dimension_numbers = #tpu.dot_dimension_numbers<[1], [0], [0], [1], [0, 0, 1, 1], [], []>} : vector<8x128xbf16>, vector<128x128xbf16>, vector<8x128xf32> -> vector<8x128xf32>
    %cst_56 = arith.constant dense<0.000000e+00> : vector<1x8xf32>
    %99 = tpu.matmul %90, %95, %cst_56 {dimension_numbers = #tpu.dot_dimension_numbers<[1], [1], [0], [0], [0, 0, 1, 0], [], []>} : vector<1x128xf32>, vector<8x128xf32>, vector<1x8xf32> -> vector<1x8xf32>
    %100 = vector.broadcast %91 : vector<1x128xf32> to vector<8x128xf32>
    %101 = arith.mulf %98, %100 : vector<8x128xf32>
    %cst_57 = arith.constant dense<0.000000e+00> : vector<8xf32>
    %102 = vector.multi_reduction <add>, %101, %cst_57 [1] : vector<8x128xf32> to vector<8xf32>
    %103 = vector.shape_cast %102 : vector<8xf32> to vector<8x1xf32>
    %104 = vector.broadcast %103 : vector<8x1xf32> to vector<8x8xf32>
    %105 = vector.broadcast %99 : vector<1x8xf32> to vector<8x8xf32>
    %106 = arith.addf %104, %105 : vector<8x8xf32>
    %cst_58 = arith.constant 0.000000e+00 : f32
    %107 = vector.broadcast %cst_58 : f32 to vector<8x8xf32>
    %108 = arith.cmpf ogt, %106, %107 : vector<8x8xf32>
    %cst_59 = arith.constant 2.000000e-01 : f32
    %109 = vector.broadcast %cst_59 : f32 to vector<8x8xf32>
    %110 = arith.mulf %109, %106 : vector<8x8xf32>
    %111 = arith.select %108, %106, %110 : vector<8x8xi1>, vector<8x8xf32>
    %cst_60 = arith.constant 0.000000e+00 : f32
    %112 = vector.broadcast %cst_60 : f32 to vector<8x8xf32>
    %113 = arith.cmpf ogt, %86, %112 : vector<8x8xf32>
    %cst_61 = arith.constant -1.000000e+30 : f32
    %114 = vector.broadcast %cst_61 : f32 to vector<8x8xf32>
    %115 = arith.select %113, %111, %114 : vector<8x8xi1>, vector<8x8xf32>
    %cst_62 = arith.constant dense<0xFF800000> : vector<8xf32>
    %116 = vector.multi_reduction <maximumf>, %115, %cst_62 [1] : vector<8x8xf32> to vector<8xf32>
    %117 = vector.shape_cast %116 : vector<8xf32> to vector<8x1xf32>
    %118 = vector.broadcast %117 : vector<8x1xf32> to vector<8x8xf32>
    %119 = arith.subf %115, %118 : vector<8x8xf32>
    %120 = math.exp %119 : vector<8x8xf32>
    %121 = arith.mulf %120, %86 : vector<8x8xf32>
    %cst_63 = arith.constant dense<0.000000e+00> : vector<8xf32>
    %122 = vector.multi_reduction <add>, %121, %cst_63 [1] : vector<8x8xf32> to vector<8xf32>
    %123 = vector.shape_cast %122 : vector<8xf32> to vector<8x1xf32>
    %cst_64 = arith.constant 9.99999968E-21 : f32
    %124 = vector.broadcast %cst_64 : f32 to vector<8x1xf32>
    %125 = arith.maximumf %123, %124 : vector<8x1xf32>
    %126 = tpu.reciprocal %125 {approx = true} : vector<8x1xf32> -> vector<8x1xf32>
    %127 = vector.broadcast %126 : vector<8x1xf32> to vector<8x8xf32>
    %128 = arith.mulf %121, %127 : vector<8x8xf32>
    %129 = arith.truncf %128 : vector<8x8xf32> to vector<8x8xbf16>
    %130 = arith.truncf %95 : vector<8x128xf32> to vector<8x128xbf16>
    %cst_65 = arith.constant dense<0.000000e+00> : vector<8x128xf32>
    %131 = tpu.matmul %129, %130, %cst_65 {dimension_numbers = #tpu.dot_dimension_numbers<[1], [0], [0], [1], [0, 0, 1, 1], [], []>} : vector<8x8xbf16>, vector<8x128xbf16>, vector<8x128xf32> -> vector<8x128xf32>
    %132 = vector.broadcast %92 : vector<1x128xf32> to vector<8x128xf32>
    %133 = arith.addf %131, %132 : vector<8x128xf32>
    %c0_66 = arith.constant 0 : index
    %c0_67 = arith.constant 0 : index
    %134 = vector.load %arg17[%c0_66, %c0_67] : memref<8x128xf32, #tpu.memory_space<vmem>>, vector<8x128xf32>
    tpu.vector_store %arg17[%c0_66, %c0_67], %133 {strides = array<i32>} : memref<8x128xf32, #tpu.memory_space<vmem>>, vector<8x128xf32>,
    %cst_68 = arith.constant dense<0.000000e+00> : vector<8xf32>
    %135 = vector.multi_reduction <add>, %128, %cst_68 [1] : vector<8x8xf32> to vector<8xf32>
    %136 = vector.shape_cast %135 : vector<8xf32> to vector<8x1xf32>
    %cst_69 = arith.constant 1.250000e-01 : f32
    %137 = vector.broadcast %cst_69 : f32 to vector<8x1xf32>
    %138 = arith.mulf %136, %137 : vector<8x1xf32>
    %139 = vector.shape_cast %138 : vector<8x1xf32> to vector<8x1xf32>
    %140 = vector.broadcast %139 : vector<8x1xf32> to vector<8x128xf32>
    %c0_70 = arith.constant 0 : index
    %c0_71 = arith.constant 0 : index
    %141 = vector.load %arg18[%c0_70, %c0_71] : memref<8x128xf32, #tpu.memory_space<vmem>>, vector<8x128xf32>
    tpu.vector_store %arg18[%c0_70, %c0_71], %140 {strides = array<i32>} : memref<8x128xf32, #tpu.memory_space<vmem>>, vector<8x128xf32>,
    return
  }
}

</mosaic_0001>

<llo_original>
// kernel: custom_gnn_forward.1
$region0: #{custom_gnn_forward.1}
  #allocation0 [shape = 'u32[]', space=smem, size = 0x4, offset = 0x4, fixed_abs, tag = 'smem constant byte address 0x4 - core index']
  #allocation1 [shape = 'u32[144,128]{1,0:T(1,128)}', space=vmem, size = 0x12000, scoped, tag = 'internal scratch']
  %s0 = inlined_call_operand.vmem [shape: f32[16,16], index: 0, kind: input, shape index: {}]
  %s1 = inlined_call_operand.vmem [shape: f32[8,16], index: 1, kind: input, shape index: {}]
  %s2 = inlined_call_operand.vmem [shape: f32[8,8], index: 2, kind: input, shape index: {}]
  %s3 = inlined_call_operand.vmem [shape: f32[16,128], index: 3, kind: input, shape index: {}]
  %s4 = inlined_call_operand.vmem [shape: f32[8,128], index: 4, kind: input, shape index: {}]
  %s5 = inlined_call_operand.vmem [shape: f32[128,128], index: 5, kind: input, shape index: {}]
  %s6 = inlined_call_operand.vmem [shape: f32[1,128], index: 6, kind: input, shape index: {}]
  %s7 = inlined_call_operand.vmem [shape: f32[128,128], index: 7, kind: input, shape index: {}]
  %s8 = inlined_call_operand.vmem [shape: f32[128,128], index: 8, kind: input, shape index: {}]
  %s9 = inlined_call_operand.vmem [shape: f32[1,128], index: 9, kind: input, shape index: {}]
  %s10 = inlined_call_operand.vmem [shape: f32[1,128], index: 10, kind: input, shape index: {}]
  %s11 = inlined_call_operand.vmem [shape: f32[1,128], index: 11, kind: input, shape index: {}]
  %s12 = inlined_call_operand.vmem [shape: f32[128,128], index: 12, kind: input, shape index: {}]
  %s13 = inlined_call_operand.vmem [shape: f32[128,128], index: 13, kind: input, shape index: {}]
  %s14 = inlined_call_operand.vmem [shape: f32[1,128], index: 14, kind: input, shape index: {}]
  %s15 = inlined_call_operand.vmem [shape: f32[1,128], index: 15, kind: input, shape index: {}]
  %s16 = inlined_call_operand.vmem [shape: f32[1,128], index: 16, kind: input, shape index: {}]
  %s17 = inlined_call_operand.hbm [shape: f32[8,128], index: 17, kind: output, shape index: {0}]
  %s18 = inlined_call_operand.vmem [shape: f32[8,128], index: 18, kind: output, shape index: {1}]
  %19 = xla_tuple %s17, %s18
  %s20 = sld [smem:[#allocation0]]
  $region86: #{custom_gnn_forward.1} parent=0
    _
  %s22 = ssub.s32 1, %s20
  %s23 = scalar_select 0, %s22, %s20
  $region1: #{custom_gnn_forward.1} parent=0
    #allocation2 [shape = 'u8[4096]{0}', space=vmem, size = 0x1000, scoped, tag = 'output window, operand 0, single buffered']
    #allocation3 [shape = 's32[1]{0}', space=sflag, size = 0x4, scoped, tag = 'scoped memory for custom_gnn_forward.1']
    %24 = vsyncpa [#allocation3], 0
    // Predicated region
    $region2: #{custom_gnn_forward.1} parent=1 // pred_check
      _
    $region3: #{custom_gnn_forward.1} parent=1 // pred_check_branch
      %26 = sbr.rel (0) target = $region5
    $region4: #{custom_gnn_forward.1} parent=1 // pred_region
      _
    $region5: #{custom_gnn_forward.1} parent=1 // pred_fallthru
      _
    // Predicated region
    $region6: #{custom_gnn_forward.1} parent=1 // pred_check
      _
    $region7: #{custom_gnn_forward.1} parent=1 // pred_check_branch
      %28 = sbr.rel (0) target = $region9
    $region8: #{custom_gnn_forward.1} parent=1 // pred_region
      _
    $region9: #{custom_gnn_forward.1} parent=1 // pred_fallthru
      _
    // Predicated region
    $region10: #{custom_gnn_forward.1} parent=1 // pred_check
      _
    $region11: #{custom_gnn_forward.1} parent=1 // pred_check_branch
      %30 = sbr.rel (0) target = $region13
    $region12: #{custom_gnn_forward.1} parent=1 // pred_region
      _
    $region13: #{custom_gnn_forward.1} parent=1 // pred_fallthru
      _
    // Predicated region
    $region14: #{custom_gnn_forward.1} parent=1 // pred_check
      _
    $region15: #{custom_gnn_forward.1} parent=1 // pred_check_branch
      %32 = sbr.rel (0) target = $region17
    $region16: #{custom_gnn_forward.1} parent=1 // pred_region
      _
    $region17: #{custom_gnn_forward.1} parent=1 // pred_fallthru
      _
    // Predicated region
    $region18: #{custom_gnn_forward.1} parent=1 // pred_check
      _
    $region19: #{custom_gnn_forward.1} parent=1 // pred_check_branch
      %34 = sbr.rel (0) target = $region21
    $region20: #{custom_gnn_forward.1} parent=1 // pred_region
      _
    $region21: #{custom_gnn_forward.1} parent=1 // pred_fallthru
      _
    // Predicated region
    $region22: #{custom_gnn_forward.1} parent=1 // pred_check
      _
    $region23: #{custom_gnn_forward.1} parent=1 // pred_check_branch
      %36 = sbr.rel (0) target = $region25
    $region24: #{custom_gnn_forward.1} parent=1 // pred_region
      _
    $region25: #{custom_gnn_forward.1} parent=1 // pred_fallthru
      _
    // Predicated region
    $region26: #{custom_gnn_forward.1} parent=1 // pred_check
      _
    $region27: #{custom_gnn_forward.1} parent=1 // pred_check_branch
      %38 = sbr.rel (0) target = $region29
    $region28: #{custom_gnn_forward.1} parent=1 // pred_region
      _
    $region29: #{custom_gnn_forward.1} parent=1 // pred_fallthru
      _
    // Predicated region
    $region30: #{custom_gnn_forward.1} parent=1 // pred_check
      _
    $region31: #{custom_gnn_forward.1} parent=1 // pred_check_branch
      %40 = sbr.rel (0) target = $region33
    $region32: #{custom_gnn_forward.1} parent=1 // pred_region
      _
    $region33: #{custom_gnn_forward.1} parent=1 // pred_fallthru
      _
    // Predicated region
    $region34: #{custom_gnn_forward.1} parent=1 // pred_check
      _
    $region35: #{custom_gnn_forward.1} parent=1 // pred_check_branch
      %42 = sbr.rel (0) target = $region37
    $region36: #{custom_gnn_forward.1} parent=1 // pred_region
      _
    $region37: #{custom_gnn_forward.1} parent=1 // pred_fallthru
      _
    // Predicated region
    $region38: #{custom_gnn_forward.1} parent=1 // pred_check
      _
    $region39: #{custom_gnn_forward.1} parent=1 // pred_check_branch
      %44 = sbr.rel (0) target = $region41
    $region40: #{custom_gnn_forward.1} parent=1 // pred_region
      _
    $region41: #{custom_gnn_forward.1} parent=1 // pred_fallthru
      _
    // Predicated region
    $region42: #{custom_gnn_forward.1} parent=1 // pred_check
      _
    $region43: #{custom_gnn_forward.1} parent=1 // pred_check_branch
      %46 = sbr.rel (0) target = $region45
    $region44: #{custom_gnn_forward.1} parent=1 // pred_region
      _
    $region45: #{custom_gnn_forward.1} parent=1 // pred_fallthru
      _
    // Predicated region
    $region46: #{custom_gnn_forward.1} parent=1 // pred_check
      _
    $region47: #{custom_gnn_forward.1} parent=1 // pred_check_branch
      %48 = sbr.rel (0) target = $region49
    $region48: #{custom_gnn_forward.1} parent=1 // pred_region
      _
    $region49: #{custom_gnn_forward.1} parent=1 // pred_fallthru
      _
    // Predicated region
    $region50: #{custom_gnn_forward.1} parent=1 // pred_check
      _
    $region51: #{custom_gnn_forward.1} parent=1 // pred_check_branch
      %50 = sbr.rel (0) target = $region53
    $region52: #{custom_gnn_forward.1} parent=1 // pred_region
      _
    $region53: #{custom_gnn_forward.1} parent=1 // pred_fallthru
      _
    // Predicated region
    $region54: #{custom_gnn_forward.1} parent=1 // pred_check
      _
    $region55: #{custom_gnn_forward.1} parent=1 // pred_check_branch
      %52 = sbr.rel (0) target = $region57
    $region56: #{custom_gnn_forward.1} parent=1 // pred_region
      _
    $region57: #{custom_gnn_forward.1} parent=1 // pred_fallthru
      _
    // Predicated region
    $region58: #{custom_gnn_forward.1} parent=1 // pred_check
      _
    $region59: #{custom_gnn_forward.1} parent=1 // pred_check_branch
      %54 = sbr.rel (0) target = $region61
    $region60: #{custom_gnn_forward.1} parent=1 // pred_region
      _
    $region61: #{custom_gnn_forward.1} parent=1 // pred_fallthru
      _
    // Predicated region
    $region62: #{custom_gnn_forward.1} parent=1 // pred_check
      _
    $region63: #{custom_gnn_forward.1} parent=1 // pred_check_branch
      %56 = sbr.rel (0) target = $region65
    $region64: #{custom_gnn_forward.1} parent=1 // pred_region
      _
    $region65: #{custom_gnn_forward.1} parent=1 // pred_fallthru
      _
    // Predicated region
    $region66: #{custom_gnn_forward.1} parent=1 // pred_check
      _
    $region67: #{custom_gnn_forward.1} parent=1 // pred_check_branch
      %58 = sbr.rel (0) target = $region69
    $region68: #{custom_gnn_forward.1} parent=1 // pred_region
      _
    $region69: #{custom_gnn_forward.1} parent=1 // pred_fallthru
      _
    %v60 = vld [vmem:[%s0] sm:$0xff]
    %v61 = vld [vmem:[%s0 + $0x8] sm:$0xff]
    %v62 = vld [vmem:[%s3] sm:$0xff]
    %v63 = vld [vmem:[%s3 + $0x8] sm:$0xff]
    %vm64 = vcmask 130048
    %v65 = vsel %vm64, %v60, 0.0
    %v66 = vsel %vm64, %v61, 0.0
    %v67 = vadd.f32 %v65, %v66
    %v68 = vrot.slane %v67, 4
    %v69 = vadd.f32 %v67, %v68
    %v70 = vrot.slane %v69, 2
    %v71 = vadd.f32 %v69, %v70
    %v72 = vrot.slane %v71, 1
    %v73 = vadd.f32 %v71, %v72
    %v74 = vmax.f32 %v73, 1.0
    %75 = vadd.xlane.f32.xlu0 %v65
    %v76 = vpop.xlane.xlu0 %75
    %77 = vadd.xlane.f32.xlu0 %v66
    %v78 = vpop.xlane.xlu0 %77
    %v79 = vmax.f32 %v76, 1.0
    %v80 = vmax.f32 %v78, 1.0
    %v81 = vrsqrt.pop %v74
    %v82 = vmul.f32 %v60, %v81
    %v83 = vmul.f32 %v61, %v81
    %v84 = vpack.c.bf16 %v83, %v82
    %v85 = vpack.c.bf16 %v63, %v62
    %v87 = vsel %vm64, %v84, 0
    %89 = vmatprep.subr.bf16.mxu0 0
    %90 = vmatpush1.bf16.msra.mxu0 %v85
    %91 = vmatprep.subr.bf16.mxu0 0
    %92 = vmatpush1.bf16.msra.mxu0 0
    %93 = vmatprep.subr.bf16.mxu0 0
    %94 = vmatpush1.bf16.msra.mxu0 0
    %95 = vmatprep.subr.bf16.mxu0 0
    %96 = vmatpush1.bf16.msra.mxu0 0
    %97 = vmatprep.subr.bf16.mxu0 0
    %98 = vmatpush1.bf16.msra.mxu0 0
    %99 = vmatprep.subr.bf16.mxu0 0
    %100 = vmatpush1.bf16.msra.mxu0 0
    %101 = vmatprep.subr.bf16.mxu0 0
    %102 = vmatpush1.bf16.msra.mxu0 0
    %103 = vmatprep.subr.bf16.mxu0 0
    %104 = vmatpush1.bf16.msra.mxu0 0
    %105 = vmatprep.subr.bf16.mxu0 0
    %106 = vmatpush1.bf16.msra.mxu0 0
    %107 = vmatprep.subr.bf16.mxu0 0
    %108 = vmatpush1.bf16.msra.mxu0 0
    %109 = vmatprep.subr.bf16.mxu0 0
    %110 = vmatpush1.bf16.msra.mxu0 0
    %111 = vmatprep.subr.bf16.mxu0 0
    %112 = vmatpush1.bf16.msra.mxu0 0
    %113 = vmatprep.subr.bf16.mxu0 0
    %114 = vmatpush1.bf16.msra.mxu0 0
    %115 = vmatprep.subr.bf16.mxu0 0
    %116 = vmatpush1.bf16.msra.mxu0 0
    %117 = vmatprep.subr.bf16.mxu0 0
    %118 = vmatpush1.bf16.msra.mxu0 0
    %119 = vmatprep.subr.bf16.mxu0 0
    %120 = vmatpush1.bf16.msra.mxu0 0
    %121 = vmatprep.mubr.bf16.mxu0 0
    %122 = vmatmul.mubr.bf16.gmra.mrb[0].mxu0 %v87
    %v123 = vpop.f32.mrb[0].mxu0
    %v124 = vadd.f32 0.0, %v123
    %v125 = vpop.f32.mrb[0].mxu0
    %v126 = vpop.f32.mrb[0].mxu0
    %v127 = vadd.f32 0.0, %v126
    %v128 = vpop.f32.mrb[0].mxu0
    %129 = vdwg.mxu0
    %v130 = vrsqrt.pop %v79
    %v131 = vrsqrt.pop %v80
    %v132 = vmul.f32 %v124, %v130
    %v133 = vmul.f32 %v127, %v131
    %v134 = vld [vmem:[%s5] sm:$0xff]
    %v135 = vld [vmem:[%s5 + $0x8] sm:$0xff]
    %v136 = vld [vmem:[%s5 + $0x10] sm:$0xff]
    %v137 = vld [vmem:[%s5 + $0x18] sm:$0xff]
    %v138 = vld [vmem:[%s5 + $0x20] sm:$0xff]
    %v139 = vld [vmem:[%s5 + $0x28] sm:$0xff]
    %v140 = vld [vmem:[%s5 + $0x30] sm:$0xff]
    %v141 = vld [vmem:[%s5 + $0x38] sm:$0xff]
    %v142 = vld [vmem:[%s5 + $0x40] sm:$0xff]
    %v143 = vld [vmem:[%s5 + $0x48] sm:$0xff]
    %v144 = vld [vmem:[%s5 + $0x50] sm:$0xff]
    %v145 = vld [vmem:[%s5 + $0x58] sm:$0xff]
    %v146 = vld [vmem:[%s5 + $0x60] sm:$0xff]
    %v147 = vld [vmem:[%s5 + $0x68] sm:$0xff]
    %v148 = vld [vmem:[%s5 + $0x70] sm:$0xff]
    %v149 = vld [vmem:[%s5 + $0x78] sm:$0xff]
    %v150 = vpack.c.bf16 %v133, %v132
    %v151 = vpack.c.bf16 %v135, %v134
    %v152 = vpack.c.bf16 %v137, %v136
    %v153 = vpack.c.bf16 %v139, %v138
    %v154 = vpack.c.bf16 %v141, %v140
    %v155 = vpack.c.bf16 %v143, %v142
    %v156 = vpack.c.bf16 %v145, %v144
    %v157 = vpack.c.bf16 %v147, %v146
    %v158 = vpack.c.bf16 %v149, %v148
    %v159 = vld [vmem:[%s6] sm:$0x1]
    %v161 = vlaneseq
    %v162 = vshrl.u32 %v161, 7
    %v163 = vsub.s32 0, %v162
    %v164 = vrot.slane %v159, %v163
    %166 = vmatprep.subr.bf16.mxu0 0
    %167 = vmatpush1.bf16.msra.mxu0 %v151
    %168 = vmatprep.subr.bf16.mxu0 0
    %169 = vmatpush1.bf16.msra.mxu0 %v152
    %170 = vmatprep.subr.bf16.mxu0 0
    %171 = vmatpush1.bf16.msra.mxu0 %v153
    %172 = vmatprep.subr.bf16.mxu0 0
    %173 = vmatpush1.bf16.msra.mxu0 %v154
    %174 = vmatprep.subr.bf16.mxu0 0
    %175 = vmatpush1.bf16.msra.mxu0 %v155
    %176 = vmatprep.subr.bf16.mxu0 0
    %177 = vmatpush1.bf16.msra.mxu0 %v156
    %178 = vmatprep.subr.bf16.mxu0 0
    %179 = vmatpush1.bf16.msra.mxu0 %v157
    %180 = vmatprep.subr.bf16.mxu0 0
    %181 = vmatpush1.bf16.msra.mxu0 %v158
    %182 = vmatprep.subr.bf16.mxu0 0
    %183 = vmatpush1.bf16.msra.mxu0 0
    %184 = vmatprep.subr.bf16.mxu0 0
    %185 = vmatpush1.bf16.msra.mxu0 0
    %186 = vmatprep.subr.bf16.mxu0 0
    %187 = vmatpush1.bf16.msra.mxu0 0
    %188 = vmatprep.subr.bf16.mxu0 0
    %189 = vmatpush1.bf16.msra.mxu0 0
    %190 = vmatprep.subr.bf16.mxu0 0
    %191 = vmatpush1.bf16.msra.mxu0 0
    %192 = vmatprep.subr.bf16.mxu0 0
    %193 = vmatpush1.bf16.msra.mxu0 0
    %194 = vmatprep.subr.bf16.mxu0 0
    %195 = vmatpush1.bf16.msra.mxu0 0
    %196 = vmatprep.subr.bf16.mxu0 0
    %197 = vmatpush1.bf16.msra.mxu0 0
    %198 = vmatprep.mubr.bf16.mxu0 0
    %199 = vmatmul.mubr.bf16.gmra.mrb[0].mxu0 %v150
    %v200 = vpop.f32.mrb[0].mxu0
    %v201 = vadd.f32 %v164, %v200
    %v202 = vpop.f32.mrb[0].mxu0
    %v203 = vpop.f32.mrb[0].mxu0
    %v204 = vadd.f32 %v164, %v203
    %v205 = vpop.f32.mrb[0].mxu0
    %206 = vdwg.mxu0
    %v207 = vld [vmem:[%s1] sm:$0xff]
    %v208 = vlaneseq
    %v209 = vshrl.u32 %v208, 7
    %v210 = vsub.s32 0, %v209
    %v211 = vrot.slane %v207, %v210
    %213 = vbcast.lane.b32.xlu0 %v211, 256
    %v214 = vpop.permute.xlu0 %213
    %s216 = sor.u32 256, 8
    %217 = vbcast.lane.b32.xlu0 %v211, %s216
    %v218 = vpop.permute.xlu0 %217
    %v219 = vlaneseq
    %v220 = vshrl.u32 %v219, 7
    %v221 = vsub.s32 1, %v220
    %v222 = vrot.slane %v207, %v221
    %224 = vbcast.lane.b32.xlu0 %v222, 256
    %v225 = vpop.permute.xlu0 %224
    %s227 = sor.u32 256, 8
    %228 = vbcast.lane.b32.xlu0 %v222, %s227
    %v229 = vpop.permute.xlu0 %228
    %v230 = vlaneseq
    %v231 = vshrl.u32 %v230, 7
    %v232 = vsub.s32 2, %v231
    %v233 = vrot.slane %v207, %v232
    %235 = vbcast.lane.b32.xlu0 %v233, 256
    %v236 = vpop.permute.xlu0 %235
    %s238 = sor.u32 256, 8
    %239 = vbcast.lane.b32.xlu0 %v233, %s238
    %v240 = vpop.permute.xlu0 %239
    %v241 = vlaneseq
    %v242 = vshrl.u32 %v241, 7
    %v243 = vsub.s32 3, %v242
    %v244 = vrot.slane %v207, %v243
    %246 = vbcast.lane.b32.xlu0 %v244, 256
    %v247 = vpop.permute.xlu0 %246
    %s249 = sor.u32 256, 8
    %250 = vbcast.lane.b32.xlu0 %v244, %s249
    %v251 = vpop.permute.xlu0 %250
    %v252 = vlaneseq
    %v253 = vshrl.u32 %v252, 7
    %v254 = vsub.s32 4, %v253
    %v255 = vrot.slane %v207, %v254
    %257 = vbcast.lane.b32.xlu0 %v255, 256
    %v258 = vpop.permute.xlu0 %257
    %s260 = sor.u32 256, 8
    %261 = vbcast.lane.b32.xlu0 %v255, %s260
    %v262 = vpop.permute.xlu0 %261
    %v263 = vlaneseq
    %v264 = vshrl.u32 %v263, 7
    %v265 = vsub.s32 5, %v264
    %v266 = vrot.slane %v207, %v265
    %268 = vbcast.lane.b32.xlu0 %v266, 256
    %v269 = vpop.permute.xlu0 %268
    %s271 = sor.u32 256, 8
    %272 = vbcast.lane.b32.xlu0 %v266, %s271
    %v273 = vpop.permute.xlu0 %272
    %v274 = vlaneseq
    %v275 = vshrl.u32 %v274, 7
    %v276 = vsub.s32 6, %v275
    %v277 = vrot.slane %v207, %v276
    %279 = vbcast.lane.b32.xlu0 %v277, 256
    %v280 = vpop.permute.xlu0 %279
    %s282 = sor.u32 256, 8
    %283 = vbcast.lane.b32.xlu0 %v277, %s282
    %v284 = vpop.permute.xlu0 %283
    %v285 = vlaneseq
    %v286 = vshrl.u32 %v285, 7
    %v287 = vsub.s32 7, %v286
    %v288 = vrot.slane %v207, %v287
    %290 = vbcast.lane.b32.xlu0 %v288, 256
    %v291 = vpop.permute.xlu0 %290
    %s293 = sor.u32 256, 8
    %294 = vbcast.lane.b32.xlu0 %v288, %s293
    %v295 = vpop.permute.xlu0 %294
    %vm296 = vcmp.gt.f32.partialorder %v214, 0.0
    %vm297 = vcmp.gt.f32.partialorder %v218, 0.0
    %vm298 = vcmp.gt.f32.partialorder %v225, 0.0
    %vm299 = vcmp.gt.f32.partialorder %v229, 0.0
    %vm300 = vcmp.gt.f32.partialorder %v236, 0.0
    %vm301 = vcmp.gt.f32.partialorder %v240, 0.0
    %vm302 = vcmp.gt.f32.partialorder %v247, 0.0
    %vm303 = vcmp.gt.f32.partialorder %v251, 0.0
    %vm304 = vcmp.gt.f32.partialorder %v258, 0.0
    %vm305 = vcmp.gt.f32.partialorder %v262, 0.0
    %vm306 = vcmp.gt.f32.partialorder %v269, 0.0
    %vm307 = vcmp.gt.f32.partialorder %v273, 0.0
    %vm308 = vcmp.gt.f32.partialorder %v280, 0.0
    %vm309 = vcmp.gt.f32.partialorder %v284, 0.0
    %vm310 = vcmp.gt.f32.partialorder %v291, 0.0
    %vm311 = vcmp.gt.f32.partialorder %v295, 0.0
    %v312 = vsel %vm296, %v201, -1e+30
    %v313 = vsel %vm297, %v204, -1e+30
    %v314 = vsel %vm298, %v201, -1e+30
    %v315 = vsel %vm299, %v204, -1e+30
    %v316 = vsel %vm300, %v201, -1e+30
    %v317 = vsel %vm301, %v204, -1e+30
    %v318 = vsel %vm302, %v201, -1e+30
    %v319 = vsel %vm303, %v204, -1e+30
    %v320 = vsel %vm304, %v201, -1e+30
    %v321 = vsel %vm305, %v204, -1e+30
    %v322 = vsel %vm306, %v201, -1e+30
    %v323 = vsel %vm307, %v204, -1e+30
    %v324 = vsel %vm308, %v201, -1e+30
    %v325 = vsel %vm309, %v204, -1e+30
    %v326 = vsel %vm310, %v201, -1e+30
    %v327 = vsel %vm311, %v204, -1e+30
    %v328 = vmax.f32 %v312, %v313
    %v329 = vrot.slane %v328, 4
    %v330 = vmax.f32 %v328, %v329
    %v331 = vrot.slane %v330, 2
    %v332 = vmax.f32 %v330, %v331
    %v333 = vrot.slane %v332, 1
    %v334 = vmax.f32 %v332, %v333
    %v335 = vmax.f32 %v314, %v315
    %v336 = vrot.slane %v335, 4
    %v337 = vmax.f32 %v335, %v336
    %v338 = vrot.slane %v337, 2
    %v339 = vmax.f32 %v337, %v338
    %v340 = vrot.slane %v339, 1
    %v341 = vmax.f32 %v339, %v340
    %v342 = vmax.f32 %v316, %v317
    %v343 = vrot.slane %v342, 4
    %v344 = vmax.f32 %v342, %v343
    %v345 = vrot.slane %v344, 2
    %v346 = vmax.f32 %v344, %v345
    %v347 = vrot.slane %v346, 1
    %v348 = vmax.f32 %v346, %v347
    %v349 = vmax.f32 %v318, %v319
    %v350 = vrot.slane %v349, 4
    %v351 = vmax.f32 %v349, %v350
    %v352 = vrot.slane %v351, 2
    %v353 = vmax.f32 %v351, %v352
    %v354 = vrot.slane %v353, 1
    %v355 = vmax.f32 %v353, %v354
    %v356 = vmax.f32 %v320, %v321
    %v357 = vrot.slane %v356, 4
    %v358 = vmax.f32 %v356, %v357
    %v359 = vrot.slane %v358, 2
    %v360 = vmax.f32 %v358, %v359
    %v361 = vrot.slane %v360, 1
    %v362 = vmax.f32 %v360, %v361
    %v363 = vmax.f32 %v322, %v323
    %v364 = vrot.slane %v363, 4
    %v365 = vmax.f32 %v363, %v364
    %v366 = vrot.slane %v365, 2
    %v367 = vmax.f32 %v365, %v366
    %v368 = vrot.slane %v367, 1
    %v369 = vmax.f32 %v367, %v368
    %v370 = vmax.f32 %v324, %v325
    %v371 = vrot.slane %v370, 4
    %v372 = vmax.f32 %v370, %v371
    %v373 = vrot.slane %v372, 2
    %v374 = vmax.f32 %v372, %v373
    %v375 = vrot.slane %v374, 1
    %v376 = vmax.f32 %v374, %v375
    %v377 = vmax.f32 %v326, %v327
    %v378 = vrot.slane %v377, 4
    %v379 = vmax.f32 %v377, %v378
    %v380 = vrot.slane %v379, 2
    %v381 = vmax.f32 %v379, %v380
    %v382 = vrot.slane %v381, 1
    %v383 = vmax.f32 %v381, %v382
    %v384 = vmax.f32 %v334, 0.0
    %v385 = vmax.f32 %v341, 0.0
    %v386 = vmax.f32 %v348, 0.0
    %v387 = vmax.f32 %v355, 0.0
    %v388 = vmax.f32 %v362, 0.0
    %v389 = vmax.f32 %v369, 0.0
    %v390 = vmax.f32 %v376, 0.0
    %v391 = vmax.f32 %v383, 0.0
    %v392 = vld [vmem:[%s7] sm:$0xff]
    %v393 = vld [vmem:[%s7 + $0x8] sm:$0xff]
    %v394 = vld [vmem:[%s7 + $0x10] sm:$0xff]
    %v395 = vld [vmem:[%s7 + $0x18] sm:$0xff]
    %v396 = vld [vmem:[%s7 + $0x20] sm:$0xff]
    %v397 = vld [vmem:[%s7 + $0x28] sm:$0xff]
    %v398 = vld [vmem:[%s7 + $0x30] sm:$0xff]
    %v399 = vld [vmem:[%s7 + $0x38] sm:$0xff]
    %v400 = vld [vmem:[%s7 + $0x40] sm:$0xff]
    %v401 = vld [vmem:[%s7 + $0x48] sm:$0xff]
    %v402 = vld [vmem:[%s7 + $0x50] sm:$0xff]
    %v403 = vld [vmem:[%s7 + $0x58] sm:$0xff]
    %v404 = vld [vmem:[%s7 + $0x60] sm:$0xff]
    %v405 = vld [vmem:[%s7 + $0x68] sm:$0xff]
    %v406 = vld [vmem:[%s7 + $0x70] sm:$0xff]
    %v407 = vld [vmem:[%s7 + $0x78] sm:$0xff]
    %v408 = vld [vmem:[%s8] sm:$0xff]
    %v409 = vld [vmem:[%s8 + $0x8] sm:$0xff]
    %v410 = vld [vmem:[%s8 + $0x10] sm:$0xff]
    %v411 = vld [vmem:[%s8 + $0x18] sm:$0xff]
    %v412 = vld [vmem:[%s8 + $0x20] sm:$0xff]
    %v413 = vld [vmem:[%s8 + $0x28] sm:$0xff]
    %v414 = vld [vmem:[%s8 + $0x30] sm:$0xff]
    %v415 = vld [vmem:[%s8 + $0x38] sm:$0xff]
    %v416 = vld [vmem:[%s8 + $0x40] sm:$0xff]
    %v417 = vld [vmem:[%s8 + $0x48] sm:$0xff]
    %v418 = vld [vmem:[%s8 + $0x50] sm:$0xff]
    %v419 = vld [vmem:[%s8 + $0x58] sm:$0xff]
    %v420 = vld [vmem:[%s8 + $0x60] sm:$0xff]
    %v421 = vld [vmem:[%s8 + $0x68] sm:$0xff]
    %v422 = vld [vmem:[%s8 + $0x70] sm:$0xff]
    %v423 = vld [vmem:[%s8 + $0x78] sm:$0xff]
    %v424 = vld [vmem:[%s9] sm:$0x1]
    %v425 = vld [vmem:[%s10] sm:$0x1]
    %v426 = vld [vmem:[%s11] sm:$0x1]
    %v427 = vpack.c.bf16 %v204, %v201
    %v428 = vpack.c.bf16 %v393, %v392
    %v429 = vpack.c.bf16 %v395, %v394
    %v430 = vpack.c.bf16 %v397, %v396
    %v431 = vpack.c.bf16 %v399, %v398
    %v432 = vpack.c.bf16 %v401, %v400
    %v433 = vpack.c.bf16 %v403, %v402
    %v434 = vpack.c.bf16 %v405, %v404
    %v435 = vpack.c.bf16 %v407, %v406
    %436 = vmatprep.subr.bf16.mxu0 0
    %437 = vmatpush1.bf16.msra.mxu0 %v428
    %438 = vmatprep.subr.bf16.mxu0 0
    %439 = vmatpush1.bf16.msra.mxu0 %v429
    %440 = vmatprep.subr.bf16.mxu0 0
    %441 = vmatpush1.bf16.msra.mxu0 %v430
    %442 = vmatprep.subr.bf16.mxu0 0
    %443 = vmatpush1.bf16.msra.mxu0 %v431
    %444 = vmatprep.subr.bf16.mxu0 0
    %445 = vmatpush1.bf16.msra.mxu0 %v432
    %446 = vmatprep.subr.bf16.mxu0 0
    %447 = vmatpush1.bf16.msra.mxu0 %v433
    %448 = vmatprep.subr.bf16.mxu0 0
    %449 = vmatpush1.bf16.msra.mxu0 %v434
    %450 = vmatprep.subr.bf16.mxu0 0
    %451 = vmatpush1.bf16.msra.mxu0 %v435
    %452 = vmatprep.subr.bf16.mxu0 0
    %453 = vmatpush1.bf16.msra.mxu0 0
    %454 = vmatprep.subr.bf16.mxu0 0
    %455 = vmatpush1.bf16.msra.mxu0 0
    %456 = vmatprep.subr.bf16.mxu0 0
    %457 = vmatpush1.bf16.msra.mxu0 0
    %458 = vmatprep.subr.bf16.mxu0 0
    %459 = vmatpush1.bf16.msra.mxu0 0
    %460 = vmatprep.subr.bf16.mxu0 0
    %461 = vmatpush1.bf16.msra.mxu0 0
    %462 = vmatprep.subr.bf16.mxu0 0
    %463 = vmatpush1.bf16.msra.mxu0 0
    %464 = vmatprep.subr.bf16.mxu0 0
    %465 = vmatpush1.bf16.msra.mxu0 0
    %466 = vmatprep.subr.bf16.mxu0 0
    %467 = vmatpush1.bf16.msra.mxu0 0
    %468 = vmatprep.mubr.bf16.mxu0 0
    %469 = vmatmul.mubr.bf16.gmra.mrb[0].mxu0 %v427
    %v470 = vpop.f32.mrb[0].mxu0
    %v471 = vadd.f32 0.0, %v470
    %v472 = vpop.f32.mrb[0].mxu0
    %v473 = vpop.f32.mrb[0].mxu0
    %v474 = vadd.f32 0.0, %v473
    %v475 = vpop.f32.mrb[0].mxu0
    %476 = vdwg.mxu0
    %v477 = vpack.c.bf16 %v384, %v384
    %v478 = vpack.c.bf16 %v385, %v385
    %v479 = vpack.c.bf16 %v386, %v386
    %v480 = vpack.c.bf16 %v387, %v387
    %v481 = vpack.c.bf16 %v388, %v388
    %v482 = vpack.c.bf16 %v389, %v389
    %v483 = vpack.c.bf16 %v390, %v390
    %v484 = vpack.c.bf16 %v391, %v391
    %v485 = vpack.c.bf16 %v409, %v408
    %v486 = vpack.c.bf16 %v411, %v410
    %v487 = vpack.c.bf16 %v413, %v412
    %v488 = vpack.c.bf16 %v415, %v414
    %v489 = vpack.c.bf16 %v417, %v416
    %v490 = vpack.c.bf16 %v419, %v418
    %v491 = vpack.c.bf16 %v421, %v420
    %v492 = vpack.c.bf16 %v423, %v422
    %v501 = vunpack.c.l.b16 %v477
    %v502 = vunpack.c.l.b16 %v478
    %v503 = vunpack.c.l.b16 %v479
    %v504 = vunpack.c.l.b16 %v480
    %v505 = vunpack.c.l.b16 %v481
    %v506 = vunpack.c.l.b16 %v482
    %v507 = vunpack.c.l.b16 %v483
    %v508 = vunpack.c.l.b16 %v484
    %vm509 = vcmask 1041409
    %v510 = vsel %vm509, %v502, %v501
    %vm511 = vcmask 1042434
    %v512 = vsel %vm511, %v503, %v510
    %vm513 = vcmask 1043459
    %v514 = vsel %vm513, %v504, %v512
    %vm515 = vcmask 1044484
    %v516 = vsel %vm515, %v505, %v514
    %vm517 = vcmask 1045509
    %v518 = vsel %vm517, %v506, %v516
    %vm519 = vcmask 1046534
    %v520 = vsel %vm519, %v507, %v518
    %vm521 = vcmask 1047559
    %v522 = vsel %vm521, %v508, %v520
    %v523 = vpack.c.b16 %v522, %v522
    %525 = vmatprep.subr.bf16.mxu0 0
    %526 = vmatpush1.bf16.msra.mxu0 %v485
    %527 = vmatprep.subr.bf16.mxu0 0
    %528 = vmatpush1.bf16.msra.mxu0 %v486
    %529 = vmatprep.subr.bf16.mxu0 0
    %530 = vmatpush1.bf16.msra.mxu0 %v487
    %531 = vmatprep.subr.bf16.mxu0 0
    %532 = vmatpush1.bf16.msra.mxu0 %v488
    %533 = vmatprep.subr.bf16.mxu0 0
    %534 = vmatpush1.bf16.msra.mxu0 %v489
    %535 = vmatprep.subr.bf16.mxu0 0
    %536 = vmatpush1.bf16.msra.mxu0 %v490
    %537 = vmatprep.subr.bf16.mxu0 0
    %538 = vmatpush1.bf16.msra.mxu0 %v491
    %539 = vmatprep.subr.bf16.mxu0 0
    %540 = vmatpush1.bf16.msra.mxu0 %v492
    %541 = vmatprep.subr.bf16.mxu0 0
    %542 = vmatpush1.bf16.msra.mxu0 0
    %543 = vmatprep.subr.bf16.mxu0 0
    %544 = vmatpush1.bf16.msra.mxu0 0
    %545 = vmatprep.subr.bf16.mxu0 0
    %546 = vmatpush1.bf16.msra.mxu0 0
    %547 = vmatprep.subr.bf16.mxu0 0
    %548 = vmatpush1.bf16.msra.mxu0 0
    %549 = vmatprep.subr.bf16.mxu0 0
    %550 = vmatpush1.bf16.msra.mxu0 0
    %551 = vmatprep.subr.bf16.mxu0 0
    %552 = vmatpush1.bf16.msra.mxu0 0
    %553 = vmatprep.subr.bf16.mxu0 0
    %554 = vmatpush1.bf16.msra.mxu0 0
    %555 = vmatprep.subr.bf16.mxu0 0
    %556 = vmatpush1.bf16.msra.mxu0 0
    %557 = vmatprep.mubr.bf16.mxu0 0
    %558 = vmatmul.mubr.bf16.gmra.mrb[0].mxu0 %v523
    %v559 = vpop.f32.mrb[0].mxu0
    %v560 = vadd.f32 0.0, %v559
    %v561 = vpop.f32.mrb[0].mxu0
    %v562 = vpop.f32.mrb[0].mxu0
    %v563 = vpop.f32.mrb[0].mxu0
    %564 = vdwg.mxu0
    %565 = vmatprep.subr.mxu0 0.0
    %566 = vmatpush1.xpose.msra.mxu0 %v471
    %567 = vmatprep.subr.mxu0 0.0
    %568 = vmatpush1.xpose.msra.mxu0 %v474
    %569 = vmatprep.subr.mxu0 0.0
    %570 = vmatpush1.xpose.msra.mxu0 0.0
    %571 = vmatprep.subr.mxu0 0.0
    %572 = vmatpush1.xpose.msra.mxu0 0.0
    %573 = vmatprep.subr.mxu0 0.0
    %574 = vmatpush1.xpose.msra.mxu0 0.0
    %575 = vmatprep.subr.mxu0 0.0
    %576 = vmatpush1.xpose.msra.mxu0 0.0
    %577 = vmatprep.subr.mxu0 0.0
    %578 = vmatpush1.xpose.msra.mxu0 0.0
    %579 = vmatprep.subr.mxu0 0.0
    %580 = vmatpush1.xpose.msra.mxu0 0.0
    %581 = vmatprep.subr.mxu0 0.0
    %582 = vmatpush1.xpose.msra.mxu0 0.0
    %583 = vmatprep.subr.mxu0 0.0
    %584 = vmatpush1.xpose.msra.mxu0 0.0
    %585 = vmatprep.subr.mxu0 0.0
    %586 = vmatpush1.xpose.msra.mxu0 0.0
    %587 = vmatprep.subr.mxu0 0.0
    %588 = vmatpush1.xpose.msra.mxu0 0.0
    %589 = vmatprep.subr.mxu0 0.0
    %590 = vmatpush1.xpose.msra.mxu0 0.0
    %591 = vmatprep.subr.mxu0 0.0
    %592 = vmatpush1.xpose.msra.mxu0 0.0
    %593 = vmatprep.subr.mxu0 0.0
    %594 = vmatpush1.xpose.msra.mxu0 0.0
    %595 = vmatprep.subr.mxu0 0.0
    %596 = vmatpush1.xpose.msra.mxu0 0.0
    %597 = vmatprep.subr.mxu0 0.0
    %598 = vmatpush1.xpose.msra.mxu0 0.0
    %599 = vmatprep.subr.mxu0 0.0
    %600 = vmatpush1.xpose.msra.mxu0 0.0
    %601 = vmatprep.subr.mxu0 0.0
    %602 = vmatpush1.xpose.msra.mxu0 0.0
    %603 = vmatprep.subr.mxu0 0.0
    %604 = vmatpush1.xpose.msra.mxu0 0.0
    %605 = vmatprep.subr.mxu0 0.0
    %606 = vmatpush1.xpose.msra.mxu0 0.0
    %607 = vmatprep.subr.mxu0 0.0
    %608 = vmatpush1.xpose.msra.mxu0 0.0
    %609 = vmatprep.subr.mxu0 0.0
    %610 = vmatpush1.xpose.msra.mxu0 0.0
    %611 = vmatprep.subr.mxu0 0.0
    %612 = vmatpush1.xpose.msra.mxu0 0.0
    %613 = vmatprep.subr.mxu0 0.0
    %614 = vmatpush1.xpose.msra.mxu0 0.0
    %615 = vmatprep.subr.mxu0 0.0
    %616 = vmatpush1.xpose.msra.mxu0 0.0
    %617 = vmatprep.subr.mxu0 0.0
    %618 = vmatpush1.xpose.msra.mxu0 0.0
    %619 = vmatprep.subr.mxu0 0.0
    %620 = vmatpush1.xpose.msra.mxu0 0.0
    %621 = vmatprep.subr.mxu0 0.0
    %622 = vmatpush1.xpose.msra.mxu0 0.0
    %623 = vmatprep.subr.mxu0 0.0
    %624 = vmatpush1.xpose.msra.mxu0 0.0
    %625 = vmatprep.subr.mxu0 0.0
    %626 = vmatpush1.xpose.msra.mxu0 0.0
    %627 = vmatprep.subr.mxu0 0.0
    %628 = vmatpush1.xpose.msra.mxu0 0.0
    %629 = vmatprep.mubr.f32.mxu0 0.0
    %630 = vmatmul.mubr.f32.gmra.mrb[0].mxu0 %v424
    %v631 = vpop.f32.mrb[0].mxu0
    %v632 = vadd.f32 0.0, %v631
    %v633 = vpop.f32.mrb[0].mxu0
    %634 = vdwg.mxu0
    %v636 = vlaneseq
    %v637 = vshrl.u32 %v636, 7
    %v638 = vsub.s32 0, %v637
    %v639 = vrot.slane %v425, %v638
    %v641 = vmul.f32 %v560, %v639
    %642 = vadd.xlane.f32.xlu0 %v641
    %v643 = vpop.xlane.xlu0 %642
    %v644 = vlaneseq
    %v645 = vshrl.u32 %v644, 7
    %v646 = vsub.s32 0, %v645
    %v647 = vrot.slane %v632, %v646
    %v648 = vadd.f32 %v643, %v647
    %vm649 = vcmp.gt.f32.partialorder %v648, 0.0
    %v650 = vmul.f32 %v648, 0.2
    %v651 = vsel %vm649, %v648, %v650
    %vm652 = vcmp.gt.f32.partialorder %v207, 0.0
    %v653 = vsel %vm652, %v651, -1e+30
    %v654 = vsel %vm64, %v653, -inf
    %655 = vmax.xlane.f32.xlu0 %v654
    %v656 = vpop.xlane.xlu0 %655
    %v657 = vsub.f32 %v653, %v656
    %v658 = vmul.f32 %v657, 1.442695
    %v659 = vpow.pop %v658
    %v660 = vmul.f32 %v659, %v207
    %v661 = vsel %vm64, %v660, 0.0
    %662 = vadd.xlane.f32.xlu0 %v661
    %v663 = vpop.xlane.xlu0 %662
    %v664 = vmax.f32 %v663, 1e-20
    %v665 = vrcp.pop %v664
    %v666 = vmul.f32 %v660, %v665
    %v667 = vpack.c.bf16 %v666, %v666
    %v668 = vpack.c.bf16 %v474, %v471
    %v670 = vlaneseq
    %v671 = vshrl.u32 %v670, 7
    %v672 = vsub.s32 0, %v671
    %v673 = vrot.slane %v426, %v672
    %v676 = vsel %vm64, %v667, 0
    %678 = vmatprep.subr.bf16.mxu0 0
    %679 = vmatpush1.bf16.msra.mxu0 %v668
    %680 = vmatprep.subr.bf16.mxu0 0
    %681 = vmatpush1.bf16.msra.mxu0 0
    %682 = vmatprep.subr.bf16.mxu0 0
    %683 = vmatpush1.bf16.msra.mxu0 0
    %684 = vmatprep.subr.bf16.mxu0 0
    %685 = vmatpush1.bf16.msra.mxu0 0
    %686 = vmatprep.subr.bf16.mxu0 0
    %687 = vmatpush1.bf16.msra.mxu0 0
    %688 = vmatprep.subr.bf16.mxu0 0
    %689 = vmatpush1.bf16.msra.mxu0 0
    %690 = vmatprep.subr.bf16.mxu0 0
    %691 = vmatpush1.bf16.msra.mxu0 0
    %692 = vmatprep.subr.bf16.mxu0 0
    %693 = vmatpush1.bf16.msra.mxu0 0
    %694 = vmatprep.subr.bf16.mxu0 0
    %695 = vmatpush1.bf16.msra.mxu0 0
    %696 = vmatprep.subr.bf16.mxu0 0
    %697 = vmatpush1.bf16.msra.mxu0 0
    %698 = vmatprep.subr.bf16.mxu0 0
    %699 = vmatpush1.bf16.msra.mxu0 0
    %700 = vmatprep.subr.bf16.mxu0 0
    %701 = vmatpush1.bf16.msra.mxu0 0
    %702 = vmatprep.subr.bf16.mxu0 0
    %703 = vmatpush1.bf16.msra.mxu0 0
    %704 = vmatprep.subr.bf16.mxu0 0
    %705 = vmatpush1.bf16.msra.mxu0 0
    %706 = vmatprep.subr.bf16.mxu0 0
    %707 = vmatpush1.bf16.msra.mxu0 0
    %708 = vmatprep.subr.bf16.mxu0 0
    %709 = vmatpush1.bf16.msra.mxu0 0
    %710 = vmatprep.mubr.bf16.mxu0 0
    %711 = vmatmul.mubr.bf16.gmra.mrb[0].mxu0 %v676
    %v712 = vpop.f32.mrb[0].mxu0
    %v713 = vadd.f32 %v673, %v712
    %v714 = vpop.f32.mrb[0].mxu0
    %v715 = vpop.f32.mrb[0].mxu0
    %v716 = vpop.f32.mrb[0].mxu0
    %717 = vdwg.mxu0
    %v718 = vld [vmem:[%s2] sm:$0xff]
    %v719 = vld [vmem:[%s4] sm:$0xff]
    %v720 = vld [vmem:[%s12] sm:$0xff]
    %v721 = vld [vmem:[%s12 + $0x8] sm:$0xff]
    %v722 = vld [vmem:[%s12 + $0x10] sm:$0xff]
    %v723 = vld [vmem:[%s12 + $0x18] sm:$0xff]
    %v724 = vld [vmem:[%s12 + $0x20] sm:$0xff]
    %v725 = vld [vmem:[%s12 + $0x28] sm:$0xff]
    %v726 = vld [vmem:[%s12 + $0x30] sm:$0xff]
    %v727 = vld [vmem:[%s12 + $0x38] sm:$0xff]
    %v728 = vld [vmem:[%s12 + $0x40] sm:$0xff]
    %v729 = vld [vmem:[%s12 + $0x48] sm:$0xff]
    %v730 = vld [vmem:[%s12 + $0x50] sm:$0xff]
    %v731 = vld [vmem:[%s12 + $0x58] sm:$0xff]
    %v732 = vld [vmem:[%s12 + $0x60] sm:$0xff]
    %v733 = vld [vmem:[%s12 + $0x68] sm:$0xff]
    %v734 = vld [vmem:[%s12 + $0x70] sm:$0xff]
    %v735 = vld [vmem:[%s12 + $0x78] sm:$0xff]
    %v736 = vld [vmem:[%s13] sm:$0xff]
    %v737 = vld [vmem:[%s13 + $0x8] sm:$0xff]
    %v738 = vld [vmem:[%s13 + $0x10] sm:$0xff]
    %v739 = vld [vmem:[%s13 + $0x18] sm:$0xff]
    %v740 = vld [vmem:[%s13 + $0x20] sm:$0xff]
    %v741 = vld [vmem:[%s13 + $0x28] sm:$0xff]
    %v742 = vld [vmem:[%s13 + $0x30] sm:$0xff]
    %v743 = vld [vmem:[%s13 + $0x38] sm:$0xff]
    %v744 = vld [vmem:[%s13 + $0x40] sm:$0xff]
    %v745 = vld [vmem:[%s13 + $0x48] sm:$0xff]
    %v746 = vld [vmem:[%s13 + $0x50] sm:$0xff]
    %v747 = vld [vmem:[%s13 + $0x58] sm:$0xff]
    %v748 = vld [vmem:[%s13 + $0x60] sm:$0xff]
    %v749 = vld [vmem:[%s13 + $0x68] sm:$0xff]
    %v750 = vld [vmem:[%s13 + $0x70] sm:$0xff]
    %v751 = vld [vmem:[%s13 + $0x78] sm:$0xff]
    %v752 = vld [vmem:[%s14] sm:$0x1]
    %v753 = vld [vmem:[%s15] sm:$0x1]
    %v754 = vld [vmem:[%s16] sm:$0x1]
    %v755 = vpack.c.bf16 %v713, %v713
    %v756 = vpack.c.bf16 %v721, %v720
    %v757 = vpack.c.bf16 %v723, %v722
    %v758 = vpack.c.bf16 %v725, %v724
    %v759 = vpack.c.bf16 %v727, %v726
    %v760 = vpack.c.bf16 %v729, %v728
    %v761 = vpack.c.bf16 %v731, %v730
    %v762 = vpack.c.bf16 %v733, %v732
    %v763 = vpack.c.bf16 %v735, %v734
    %764 = vmatprep.subr.bf16.mxu0 0
    %765 = vmatpush1.bf16.msra.mxu0 %v756
    %766 = vmatprep.subr.bf16.mxu0 0
    %767 = vmatpush1.bf16.msra.mxu0 %v757
    %768 = vmatprep.subr.bf16.mxu0 0
    %769 = vmatpush1.bf16.msra.mxu0 %v758
    %770 = vmatprep.subr.bf16.mxu0 0
    %771 = vmatpush1.bf16.msra.mxu0 %v759
    %772 = vmatprep.subr.bf16.mxu0 0
    %773 = vmatpush1.bf16.msra.mxu0 %v760
    %774 = vmatprep.subr.bf16.mxu0 0
    %775 = vmatpush1.bf16.msra.mxu0 %v761
    %776 = vmatprep.subr.bf16.mxu0 0
    %777 = vmatpush1.bf16.msra.mxu0 %v762
    %778 = vmatprep.subr.bf16.mxu0 0
    %779 = vmatpush1.bf16.msra.mxu0 %v763
    %780 = vmatprep.subr.bf16.mxu0 0
    %781 = vmatpush1.bf16.msra.mxu0 0
    %782 = vmatprep.subr.bf16.mxu0 0
    %783 = vmatpush1.bf16.msra.mxu0 0
    %784 = vmatprep.subr.bf16.mxu0 0
    %785 = vmatpush1.bf16.msra.mxu0 0
    %786 = vmatprep.subr.bf16.mxu0 0
    %787 = vmatpush1.bf16.msra.mxu0 0
    %788 = vmatprep.subr.bf16.mxu0 0
    %789 = vmatpush1.bf16.msra.mxu0 0
    %790 = vmatprep.subr.bf16.mxu0 0
    %791 = vmatpush1.bf16.msra.mxu0 0
    %792 = vmatprep.subr.bf16.mxu0 0
    %793 = vmatpush1.bf16.msra.mxu0 0
    %794 = vmatprep.subr.bf16.mxu0 0
    %795 = vmatpush1.bf16.msra.mxu0 0
    %796 = vmatprep.mubr.bf16.mxu0 0
    %797 = vmatmul.mubr.bf16.gmra.mrb[0].mxu0 %v755
    %v798 = vpop.f32.mrb[0].mxu0
    %v799 = vadd.f32 0.0, %v798
    %v800 = vpop.f32.mrb[0].mxu0
    %v801 = vpop.f32.mrb[0].mxu0
    %v802 = vpop.f32.mrb[0].mxu0
    %803 = vdwg.mxu0
    %v804 = vpack.c.bf16 %v719, %v719
    %v805 = vpack.c.bf16 %v737, %v736
    %v806 = vpack.c.bf16 %v739, %v738
    %v807 = vpack.c.bf16 %v741, %v740
    %v808 = vpack.c.bf16 %v743, %v742
    %v809 = vpack.c.bf16 %v745, %v744
    %v810 = vpack.c.bf16 %v747, %v746
    %v811 = vpack.c.bf16 %v749, %v748
    %v812 = vpack.c.bf16 %v751, %v750
    %813 = vmatprep.subr.bf16.mxu0 0
    %814 = vmatpush1.bf16.msra.mxu0 %v805
    %815 = vmatprep.subr.bf16.mxu0 0
    %816 = vmatpush1.bf16.msra.mxu0 %v806
    %817 = vmatprep.subr.bf16.mxu0 0
    %818 = vmatpush1.bf16.msra.mxu0 %v807
    %819 = vmatprep.subr.bf16.mxu0 0
    %820 = vmatpush1.bf16.msra.mxu0 %v808
    %821 = vmatprep.subr.bf16.mxu0 0
    %822 = vmatpush1.bf16.msra.mxu0 %v809
    %823 = vmatprep.subr.bf16.mxu0 0
    %824 = vmatpush1.bf16.msra.mxu0 %v810
    %825 = vmatprep.subr.bf16.mxu0 0
    %826 = vmatpush1.bf16.msra.mxu0 %v811
    %827 = vmatprep.subr.bf16.mxu0 0
    %828 = vmatpush1.bf16.msra.mxu0 %v812
    %829 = vmatprep.subr.bf16.mxu0 0
    %830 = vmatpush1.bf16.msra.mxu0 0
    %831 = vmatprep.subr.bf16.mxu0 0
    %832 = vmatpush1.bf16.msra.mxu0 0
    %833 = vmatprep.subr.bf16.mxu0 0
    %834 = vmatpush1.bf16.msra.mxu0 0
    %835 = vmatprep.subr.bf16.mxu0 0
    %836 = vmatpush1.bf16.msra.mxu0 0
    %837 = vmatprep.subr.bf16.mxu0 0
    %838 = vmatpush1.bf16.msra.mxu0 0
    %839 = vmatprep.subr.bf16.mxu0 0
    %840 = vmatpush1.bf16.msra.mxu0 0
    %841 = vmatprep.subr.bf16.mxu0 0
    %842 = vmatpush1.bf16.msra.mxu0 0
    %843 = vmatprep.subr.bf16.mxu0 0
    %844 = vmatpush1.bf16.msra.mxu0 0
    %845 = vmatprep.mubr.bf16.mxu0 0
    %846 = vmatmul.mubr.bf16.gmra.mrb[0].mxu0 %v804
    %v847 = vpop.f32.mrb[0].mxu0
    %v848 = vadd.f32 0.0, %v847
    %v849 = vpop.f32.mrb[0].mxu0
    %v850 = vpop.f32.mrb[0].mxu0
    %v851 = vpop.f32.mrb[0].mxu0
    %852 = vdwg.mxu0
    %853 = vmatprep.subr.mxu0 0.0
    %854 = vmatpush1.xpose.msra.mxu0 %v799
    %855 = vmatprep.subr.mxu0 0.0
    %856 = vmatpush1.xpose.msra.mxu0 0.0
    %857 = vmatprep.subr.mxu0 0.0
    %858 = vmatpush1.xpose.msra.mxu0 0.0
    %859 = vmatprep.subr.mxu0 0.0
    %860 = vmatpush1.xpose.msra.mxu0 0.0
    %861 = vmatprep.subr.mxu0 0.0
    %862 = vmatpush1.xpose.msra.mxu0 0.0
    %863 = vmatprep.subr.mxu0 0.0
    %864 = vmatpush1.xpose.msra.mxu0 0.0
    %865 = vmatprep.subr.mxu0 0.0
    %866 = vmatpush1.xpose.msra.mxu0 0.0
    %867 = vmatprep.subr.mxu0 0.0
    %868 = vmatpush1.xpose.msra.mxu0 0.0
    %869 = vmatprep.subr.mxu0 0.0
    %870 = vmatpush1.xpose.msra.mxu0 0.0
    %871 = vmatprep.subr.mxu0 0.0
    %872 = vmatpush1.xpose.msra.mxu0 0.0
    %873 = vmatprep.subr.mxu0 0.0
    %874 = vmatpush1.xpose.msra.mxu0 0.0
    %875 = vmatprep.subr.mxu0 0.0
    %876 = vmatpush1.xpose.msra.mxu0 0.0
    %877 = vmatprep.subr.mxu0 0.0
    %878 = vmatpush1.xpose.msra.mxu0 0.0
    %879 = vmatprep.subr.mxu0 0.0
    %880 = vmatpush1.xpose.msra.mxu0 0.0
    %881 = vmatprep.subr.mxu0 0.0
    %882 = vmatpush1.xpose.msra.mxu0 0.0
    %883 = vmatprep.subr.mxu0 0.0
    %884 = vmatpush1.xpose.msra.mxu0 0.0
    %885 = vmatprep.subr.mxu0 0.0
    %886 = vmatpush1.xpose.msra.mxu0 0.0
    %887 = vmatprep.subr.mxu0 0.0
    %888 = vmatpush1.xpose.msra.mxu0 0.0
    %889 = vmatprep.subr.mxu0 0.0
    %890 = vmatpush1.xpose.msra.mxu0 0.0
    %891 = vmatprep.subr.mxu0 0.0
    %892 = vmatpush1.xpose.msra.mxu0 0.0
    %893 = vmatprep.subr.mxu0 0.0
    %894 = vmatpush1.xpose.msra.mxu0 0.0
    %895 = vmatprep.subr.mxu0 0.0
    %896 = vmatpush1.xpose.msra.mxu0 0.0
    %897 = vmatprep.subr.mxu0 0.0
    %898 = vmatpush1.xpose.msra.mxu0 0.0
    %899 = vmatprep.subr.mxu0 0.0
    %900 = vmatpush1.xpose.msra.mxu0 0.0
    %901 = vmatprep.subr.mxu0 0.0
    %902 = vmatpush1.xpose.msra.mxu0 0.0
    %903 = vmatprep.subr.mxu0 0.0
    %904 = vmatpush1.xpose.msra.mxu0 0.0
    %905 = vmatprep.subr.mxu0 0.0
    %906 = vmatpush1.xpose.msra.mxu0 0.0
    %907 = vmatprep.subr.mxu0 0.0
    %908 = vmatpush1.xpose.msra.mxu0 0.0
    %909 = vmatprep.subr.mxu0 0.0
    %910 = vmatpush1.xpose.msra.mxu0 0.0
    %911 = vmatprep.subr.mxu0 0.0
    %912 = vmatpush1.xpose.msra.mxu0 0.0
    %913 = vmatprep.subr.mxu0 0.0
    %914 = vmatpush1.xpose.msra.mxu0 0.0
    %915 = vmatprep.subr.mxu0 0.0
    %916 = vmatpush1.xpose.msra.mxu0 0.0
    %917 = vmatprep.mubr.f32.mxu0 0.0
    %918 = vmatmul.mubr.f32.gmra.mrb[0].mxu0 %v752
    %v919 = vpop.f32.mrb[0].mxu0
    %v920 = vadd.f32 0.0, %v919
    %v921 = vpop.f32.mrb[0].mxu0
    %922 = vdwg.mxu0
    %v924 = vlaneseq
    %v925 = vshrl.u32 %v924, 7
    %v926 = vsub.s32 0, %v925
    %v927 = vrot.slane %v753, %v926
    %v929 = vmul.f32 %v848, %v927
    %930 = vadd.xlane.f32.xlu0 %v929
    %v931 = vpop.xlane.xlu0 %930
    %v932 = vlaneseq
    %v933 = vshrl.u32 %v932, 7
    %v934 = vsub.s32 0, %v933
    %v935 = vrot.slane %v920, %v934
    %v936 = vadd.f32 %v931, %v935
    %vm937 = vcmp.gt.f32.partialorder %v936, 0.0
    %v938 = vmul.f32 %v936, 0.2
    %v939 = vsel %vm937, %v936, %v938
    %vm940 = vcmp.gt.f32.partialorder %v718, 0.0
    %v941 = vsel %vm940, %v939, -1e+30
    %vm942 = vcmask 64512
    %v943 = vsel %vm942, %v941, -inf
    %944 = vmax.xlane.f32.xlu0 %v943
    %v945 = vpop.xlane.xlu0 %944
    %v946 = vsub.f32 %v941, %v945
    %v947 = vmul.f32 %v946, 1.442695
    %v948 = vpow.pop %v947
    %v949 = vmul.f32 %v948, %v718
    %v950 = vsel %vm942, %v949, 0.0
    %951 = vadd.xlane.f32.xlu0 %v950
    %v952 = vpop.xlane.xlu0 %951
    %v953 = vmax.f32 %v952, 1e-20
    %v954 = vrcp.pop %v953
    %v955 = vmul.f32 %v949, %v954
    %v956 = vpack.c.bf16 %v955, %v955
    %v957 = vpack.c.bf16 %v799, %v799
    %v959 = vlaneseq
    %v960 = vshrl.u32 %v959, 7
    %v961 = vsub.s32 0, %v960
    %v962 = vrot.slane %v754, %v961
    %v965 = vsel %vm942, %v956, 0
    %vm967 = vcmask 1043456
    %v969 = vsel %vm967, %v957, 0
    %971 = vmatprep.subr.bf16.mxu0 0
    %972 = vmatpush1.bf16.msra.mxu0 %v969
    %973 = vmatprep.subr.bf16.mxu0 0
    %974 = vmatpush1.bf16.msra.mxu0 0
    %975 = vmatprep.subr.bf16.mxu0 0
    %976 = vmatpush1.bf16.msra.mxu0 0
    %977 = vmatprep.subr.bf16.mxu0 0
    %978 = vmatpush1.bf16.msra.mxu0 0
    %979 = vmatprep.subr.bf16.mxu0 0
    %980 = vmatpush1.bf16.msra.mxu0 0
    %981 = vmatprep.subr.bf16.mxu0 0
    %982 = vmatpush1.bf16.msra.mxu0 0
    %983 = vmatprep.subr.bf16.mxu0 0
    %984 = vmatpush1.bf16.msra.mxu0 0
    %985 = vmatprep.subr.bf16.mxu0 0
    %986 = vmatpush1.bf16.msra.mxu0 0
    %987 = vmatprep.subr.bf16.mxu0 0
    %988 = vmatpush1.bf16.msra.mxu0 0
    %989 = vmatprep.subr.bf16.mxu0 0
    %990 = vmatpush1.bf16.msra.mxu0 0
    %991 = vmatprep.subr.bf16.mxu0 0
    %992 = vmatpush1.bf16.msra.mxu0 0
    %993 = vmatprep.subr.bf16.mxu0 0
    %994 = vmatpush1.bf16.msra.mxu0 0
    %995 = vmatprep.subr.bf16.mxu0 0
    %996 = vmatpush1.bf16.msra.mxu0 0
    %997 = vmatprep.subr.bf16.mxu0 0
    %998 = vmatpush1.bf16.msra.mxu0 0
    %999 = vmatprep.subr.bf16.mxu0 0
    %1000 = vmatpush1.bf16.msra.mxu0 0
    %1001 = vmatprep.subr.bf16.mxu0 0
    %1002 = vmatpush1.bf16.msra.mxu0 0
    %1003 = vmatprep.mubr.bf16.mxu0 0
    %1004 = vmatmul.mubr.bf16.gmra.mrb[0].mxu0 %v965
    %v1005 = vpop.f32.mrb[0].mxu0
    %v1006 = vadd.f32 %v962, %v1005
    %v1007 = vpop.f32.mrb[0].mxu0
    %v1008 = vpop.f32.mrb[0].mxu0
    %v1009 = vpop.f32.mrb[0].mxu0
    %1010 = vdwg.mxu0
    %1011 = vst [vmem:[#allocation2] sm:$0xff] %v1006
    %v1012 = vsel %vm942, %v955, 0.0
    %1013 = vadd.xlane.f32.xlu0 %v1012
    %v1014 = vpop.xlane.xlu0 %1013
    %v1015 = vmul.f32 %v1014, 0.125
    %1016 = vst [vmem:[%s18] sm:$0xff] %v1015
    // Predicated region
    $region70: #{custom_gnn_forward.1} parent=1 // pred_check
      _
    $region71: #{custom_gnn_forward.1} parent=1 // pred_check_branch
      %1018 = sbr.rel (0) target = $region73
    $region72: #{custom_gnn_forward.1} parent=1 // pred_region
      %s1020 = ssub.s32 128, 128
      %1021 = vsyncadd [#allocation3], %s1020
      %s1023 = sshll.u32 [#allocation2], 4
      %s1024 = int_to_ptr.vmem [resolvable:$true] %s1023
      %1026 = dma.vmem_to_hbm [thread:$0]  %s1024, 128, %s17, [#allocation3]
    $region73: #{custom_gnn_forward.1} parent=1 // pred_fallthru
      _
    // Predicated region
    $region74: #{custom_gnn_forward.1} parent=1 // pred_check
      _
    $region75: #{custom_gnn_forward.1} parent=1 // pred_check_branch
      %1028 = sbr.rel (0) target = $region77
    $region76: #{custom_gnn_forward.1} parent=1 // pred_region
      _
    $region77: #{custom_gnn_forward.1} parent=1 // pred_fallthru
      _
    // Predicated region
    $region78: #{custom_gnn_forward.1} parent=1 // pred_check
      _
    $region79: #{custom_gnn_forward.1} parent=1 // pred_check_branch
      %1030 = sbr.rel (0) target = $region81
    $region80: #{custom_gnn_forward.1} parent=1 // pred_region
      %1031 = dma.done [#allocation3], 128
    $region81: #{custom_gnn_forward.1} parent=1 // pred_fallthru
      _
    // Predicated region
    $region82: #{custom_gnn_forward.1} parent=1 // pred_check
      _
    $region83: #{custom_gnn_forward.1} parent=1 // pred_check_branch
      %1033 = sbr.rel (0) target = $region85
    $region84: #{custom_gnn_forward.1} parent=1 // pred_region
      _
    $region85: #{custom_gnn_forward.1} parent=1 // pred_fallthru
      _
    %1034 = vsyncpa [#allocation3], 1

</llo_original>
